<compile_context>
chip_gen: v6e
topology: v6e:2x2x1
jax: 0.10.0
libtpu: 0.0.40
codegen_flags: <defaults>
</compile_context>

<pallas_src>
import functools

import jax
import jax.numpy as jnp
from jax.experimental import pallas as pl
from jax.experimental.pallas import tpu as pltpu


def _roll_rows_kernel(shift_ref, x_ref, o_ref, *, length):
    """Circularly shifts every row of the (bt, N) tile by shift_ref[0]
    (torch.roll semantics).  Rotate on the XLU; only output stores touch the
    vector-store slot."""
    shift = jnp.mod(shift_ref[0], length).astype(jnp.int32)  # >= 0, handles s < 0
    o_ref[...] = pltpu.roll(x_ref[...], shift, axis=1)


def _pick_row_block(num_rows, row_bytes, target_bytes=4 << 20):
    """Rows per block: ~4 MiB tiles, >=2 grid steps when possible (v7x has
    2 TensorCores sharing the "parallel" axis), and respect the (8, 128)
    block-shape rule on the sublane axis for partial blocks."""
    bt = max(1, target_bytes // max(1, row_bytes))
    if num_rows >= 2:
        bt = min(bt, pl.cdiv(num_rows, 2))
    bt = min(bt, num_rows)
    if bt != num_rows:
        bt = (bt // 8) * 8                       # sublane divisibility for partial blocks
        if bt == 0:
            bt = num_rows if num_rows <= 8 else 8
        bt = min(bt, num_rows)
    return bt


def _roll_rows(x2d, shift_elems):
    """x2d: [R, N]; shift_elems: int32 array of shape (1,).  Rolls every row of
    x2d along its last (lane) axis by the same dynamic amount."""
    R, N = x2d.shape
    itemsize = jnp.dtype(x2d.dtype).itemsize
    bt = _pick_row_block(R, N * itemsize)
    block_bytes = bt * N * itemsize
    # in + out, double-buffered, plus slack; never below the 32 MiB scoped
    # default, never above v7x's 64 MiB physical VMEM per TensorCore.
    vmem_limit = int(min(max(32 << 20, 4 * block_bytes + (2 << 20)), 64 << 20))

    kernel = functools.partial(_roll_rows_kernel, length=N)
    return pl.pallas_call(
        kernel,
        out_shape=jax.ShapeDtypeStruct((R, N), x2d.dtype),
        grid_spec=pltpu.PrefetchScalarGridSpec(
            num_scalar_prefetch=1,
            grid=(pl.cdiv(R, bt),),
            in_specs=[pl.BlockSpec((bt, N), lambda i, s: (i, 0))],
            out_specs=pl.BlockSpec((bt, N), lambda i, s: (i, 0)),
        ),
        compiler_params=pltpu.CompilerParams(
            dimension_semantics=("parallel",),
            vmem_limit_bytes=vmem_limit,
        ),
        cost_estimate=pl.CostEstimate(
            flops=0,
            transcendentals=0,
            bytes_accessed=2 * R * N * itemsize,
        ),
    )(shift_elems, x2d)


class RandomShift:
    """JAX/Pallas port of speechbrain RandomShift (forward pass)."""

    def __init__(self, min_shift=0, max_shift=0, dim=1):
        if max_shift < min_shift:
            raise ValueError("max_shift must be  >= min_shift")
        self.min_shift = min_shift
        self.max_shift = max_shift
        self.dim = dim

    def __call__(self, waveforms, lengths, key):
        # torch.randint(low, high+1, size=(1,)) equivalent (RNG glue outside kernel).
        n_shifts = jax.random.randint(
            key, (1,), self.min_shift, self.max_shift + 1, dtype=jnp.int32)

        x = waveforms
        if x.ndim == 2:                            # [B, T]
            if self.dim != 1:
                raise ValueError("dim must be 1 for [batch, time] inputs")
            rolled = _roll_rows(x, n_shifts)       # time already on the lane axis
        elif x.ndim == 3:                          # [B, T, C]
            B, T, C = x.shape
            if self.dim == 1:
                # Rolling [T, C] along T by s == rolling the flat row-major
                # [T*C] vector by s*C -> lane-dense roll, no transposes.
                flat = x.reshape(B, T * C)
                rolled = _roll_rows(flat, n_shifts * C).reshape(B, T, C)
            elif self.dim == 2:
                flat = x.reshape(B * T, C)         # channel axis already on lanes
                rolled = _roll_rows(flat, n_shifts).reshape(B, T, C)
            else:
                raise ValueError("dim must be 1 or 2")  # TODO(synk): dim=0 (batch roll) not supported
        else:
            raise ValueError("waveforms must be [batch, time] or [batch, time, channels]")

        if self.dim == 1:
            # lengths update (tiny elementwise glue; matches torch semantics;
            # dim==2 leaves lengths unchanged, as in the original module).
            lengths = lengths + n_shifts.astype(lengths.dtype) / waveforms.shape[1]
            lengths = jnp.clip(lengths, 0.0, 1.0)
        return rolled, lengths


if __name__ == "__main__":
    key = jax.random.PRNGKey(0)
    k_sig, k1, k2, k3 = jax.random.split(key, 4)

    B, T, C = 4, 64, 128
    signal3 = jax.random.normal(k_sig, (B, T, C), dtype=jnp.float32)
    lengths = jnp.array([0.2, 0.8, 0.9, 1.0], dtype=jnp.float32)

    # --- time shift (dim=1) on [B, T, C] ---
    aug_t = RandomShift(min_shift=-10, max_shift=10, dim=1)
    out_t, len_t = aug_t(signal3, lengths, k1)
    out_t = jax.block_until_ready(out_t)
    s1 = int(jax.random.randint(k1, (1,), -10, 11, dtype=jnp.int32)[0])
    ref_t = jnp.roll(signal3, s1, axis=1)
    ref_len = jnp.clip(lengths + s1 / T, 0.0, 1.0)
    assert out_t.shape == signal3.shape and out_t.dtype == signal3.dtype
    assert jnp.array_equal(out_t, ref_t), "time roll mismatch"
    assert jnp.allclose(len_t, ref_len, atol=1e-6), "lengths mismatch"

    # --- frequency / channel shift (dim=2) on [B, T, C] ---
    aug_f = RandomShift(min_shift=-10, max_shift=10, dim=2)
    out_f, len_f = aug_f(signal3, lengths, k2)
    out_f = jax.block_until_ready(out_f)
    s2 = int(jax.random.randint(k2, (1,), -10, 11, dtype=jnp.int32)[0])
    ref_f = jnp.roll(signal3, s2, axis=2)
    assert jnp.array_equal(out_f, ref_f), "channel roll mismatch"
    assert jnp.array_equal(len_f, lengths), "lengths must be unchanged for dim=2"

    # --- mono time shift (dim=1) on [B, T] ---
    T2 = 256
    signal2 = jax.random.normal(k_sig, (B, T2), dtype=jnp.float32)
    out_m, len_m = aug_t(signal2, lengths, k3)
    out_m = jax.block_until_ready(out_m)
    s3 = int(jax.random.randint(k3, (1,), -10, 11, dtype=jnp.int32)[0])
    ref_m = jnp.roll(signal2, s3, axis=1)
    ref_len_m = jnp.clip(lengths + s3 / T2, 0.0, 1.0)
    assert jnp.array_equal(out_m, ref_m), "mono time roll mismatch"
    assert jnp.allclose(len_m, ref_len_m, atol=1e-6), "mono lengths mismatch"

    print("KERNEL_OK")
</pallas_src>

<mosaic_0001>
module attributes {stable_mosaic.version = 11 : i64} {
  func.func @_roll_rows_kernel(%arg0: i32, %arg1: memref<1xi32, #tpu.memory_space<smem>>, %arg2: memref<4x8192xf32, #tpu.memory_space<vmem>>, %arg3: memref<4x8192xf32, #tpu.memory_space<vmem>>) attributes {dimension_semantics = [#tpu.dimension_semantics<parallel>], iteration_bounds = array<i64: 1>, scalar_prefetch = 1 : i64, scratch_operands = 0 : i64, tpu.core_type = #tpu.core_type<tc>, window_params = [{transform_indices = @transform_0, window_bounds = array<i64: 4, 8192>}, {transform_indices = @transform_1, window_bounds = array<i64: 4, 8192>}]} {
    %c0 = arith.constant 0 : index
    %0 = memref.load %arg1[%c0] : memref<1xi32, #tpu.memory_space<smem>>
    %c8192_i32 = arith.constant 8192 : i32
    %c0_i32 = arith.constant 0 : i32
    %1 = arith.cmpi eq, %c8192_i32, %c0_i32 : i32
    %c1_i32 = arith.constant 1 : i32
    %2 = arith.select %1, %c1_i32, %c8192_i32 : i32
    %3 = arith.remsi %0, %2 : i32
    %c0_i32_0 = arith.constant 0 : i32
    %4 = arith.cmpi ne, %3, %c0_i32_0 : i32
    %c0_i32_1 = arith.constant 0 : i32
    %5 = arith.cmpi slt, %3, %c0_i32_1 : i32
    %c0_i32_2 = arith.constant 0 : i32
    %6 = arith.cmpi slt, %2, %c0_i32_2 : i32
    %7 = arith.xori %5, %6 : i1
    %8 = arith.andi %7, %4 : i1
    %9 = arith.addi %3, %2 : i32
    %10 = arith.select %8, %9, %3 : i32
    %c0_3 = arith.constant 0 : index
    %c0_4 = arith.constant 0 : index
    %11 = vector.load %arg2[%c0_3, %c0_4] : memref<4x8192xf32, #tpu.memory_space<vmem>>, vector<4x8192xf32>
    %12 = tpu.dynamic_rotate %11 by %10 dim 1 : vector<4x8192xf32>, i32 -> vector<4x8192xf32>
    %c0_5 = arith.constant 0 : index
    %c0_6 = arith.constant 0 : index
    %13 = vector.load %arg3[%c0_5, %c0_6] : memref<4x8192xf32, #tpu.memory_space<vmem>>, vector<4x8192xf32>
    tpu.vector_store %arg3[%c0_5, %c0_6], %12 {strides = array<i32>} : memref<4x8192xf32, #tpu.memory_space<vmem>>, vector<4x8192xf32>,
    return
  }
  func.func @transform_0(%arg0: i32, %arg1: memref<1xi32, #tpu.memory_space<smem>>) -> (i32, i32) {
    %c0_i32 = arith.constant 0 : i32
    %c0_i32_0 = arith.constant 0 : i32
    return %arg0, %c0_i32 : i32, i32
  }
  func.func @transform_1(%arg0: i32, %arg1: memref<1xi32, #tpu.memory_space<smem>>) -> (i32, i32) {
    %c0_i32 = arith.constant 0 : i32
    %c0_i32_0 = arith.constant 0 : i32
    return %arg0, %c0_i32 : i32, i32
  }
}

</mosaic_0001>

<llo_original>
// kernel: tpu_custom_call.1
$region0: #{tpu_custom_call.1}
  #allocation0 [shape = 'u32[]', space=smem, size = 0x4, offset = 0x4, fixed_abs, tag = 'smem constant byte address 0x4 - core index']
  #allocation1 [shape = 'u32[144,128]{1,0:T(1,128)}', space=vmem, size = 0x12000, scoped, tag = 'internal scratch']
  #allocation2 [shape = 's32[1]{0}', space=sflag, size = 0x4, scoped, tag = 'scoped memory for tpu_custom_call.1']
  #allocation3 [shape = 's32[1]{0:T(128)S(6)}', space=smem, size = 0x200, scoped, tag = 'prefetched SMEM operand 0']
  %s0 = inlined_call_operand.<no memory space> [shape: s32[1], index: 0, kind: input, shape index: {}]
  %s1 = inlined_call_operand.hbm [shape: f32[4,8192], index: 1, kind: input, shape index: {}]
  %s2 = inlined_call_operand.hbm [shape: f32[4,8192], index: 2, kind: output, shape index: {}]
  %s3 = sld [smem:[#allocation0]]
  $region18: #{tpu_custom_call.1} parent=0
    _
  %s5 = ssub.s32 1, %s3
  %s6 = scalar_select 0, %s5, %s3
  %7 = sst [smem:[#allocation3]] %s0
  $region1: #{tpu_custom_call.1} parent=0
    #allocation4 [shape = 'u8[131072]{0}', space=vmem, size = 0x20000, scoped, tag = 'input window, operand 1, single buffered']
    #allocation5 [shape = 's32[1]{0}', space=sflag, size = 0x4, scoped, tag = 'scoped memory for tpu_custom_call.1']
    #allocation6 [shape = 's32[1]{0}', space=sflag, size = 0x4, scoped, tag = 'scoped memory for tpu_custom_call.1']
    #allocation7 [shape = 'u8[131072]{0}', space=vmem, size = 0x20000, scoped, tag = 'output window, operand 0, single buffered']
    %8 = vsyncpa [#allocation5], 0
    %9 = vsyncpa [#allocation6], 0
    // Predicated region
    $region2: #{tpu_custom_call.1} parent=1 // pred_check
      _
    $region3: #{tpu_custom_call.1} parent=1 // pred_check_branch
      %11 = sbr.rel (0) target = $region5
    $region4: #{tpu_custom_call.1} parent=1 // pred_region
      %s13 = ssub.s32 4096, 4096
      %14 = vsyncadd [#allocation5], %s13
      %s16 = sshll.u32 [#allocation4], 4
      %s17 = int_to_ptr.vmem [resolvable:$true] %s16
      %19 = dma.hbm_to_vmem [thread:$0]  %s1, 4096, %s17, [#allocation5]
    $region5: #{tpu_custom_call.1} parent=1 // pred_fallthru
      _
    // Predicated region
    $region6: #{tpu_custom_call.1} parent=1 // pred_check
      _
    $region7: #{tpu_custom_call.1} parent=1 // pred_check_branch
      %21 = sbr.rel (0) target = $region9
    $region8: #{tpu_custom_call.1} parent=1 // pred_region
      %22 = dma.done [#allocation5], 4096
    $region9: #{tpu_custom_call.1} parent=1 // pred_fallthru
      _
    %s23 = sld [smem:[#allocation3]]
    %p24 = scmp.lt.s32.totalorder %s23, 0
    %s25 = ssub.s32 0, %s23
    %s26 = scalar_select %p24, %s25, %s23
    %s27 = sand.u32 %s26, 8191
    %s28 = ssub.s32 0, %s27
    %s29 = scalar_select %p24, %s28, %s27
    %p30 = scmp.ne.s32.totalorder %s29, 0
    %p31 = scmp.lt.s32.totalorder %s29, 0
    %p32 = pnand %p31, %p30
    %p33 = pneg %p32
    %s34 = sadd.s32 %s29, 8192
    %s35 = scalar_select %p33, %s34, %s29
    %v36 = vld [vmem:[#allocation4] sm:$0xff]
    %v37 = vld [vmem:[#allocation4 + $0x8] sm:$0xff]
    %v38 = vld [vmem:[#allocation4 + $0x10] sm:$0xff]
    %v39 = vld [vmem:[#allocation4 + $0x18] sm:$0xff]
    %v40 = vld [vmem:[#allocation4 + $0x20] sm:$0xff]
    %v41 = vld [vmem:[#allocation4 + $0x28] sm:$0xff]
    %v42 = vld [vmem:[#allocation4 + $0x30] sm:$0xff]
    %v43 = vld [vmem:[#allocation4 + $0x38] sm:$0xff]
    %v44 = vld [vmem:[#allocation4 + $0x40] sm:$0xff]
    %v45 = vld [vmem:[#allocation4 + $0x48] sm:$0xff]
    %v46 = vld [vmem:[#allocation4 + $0x50] sm:$0xff]
    %v47 = vld [vmem:[#allocation4 + $0x58] sm:$0xff]
    %v48 = vld [vmem:[#allocation4 + $0x60] sm:$0xff]
    %v49 = vld [vmem:[#allocation4 + $0x68] sm:$0xff]
    %v50 = vld [vmem:[#allocation4 + $0x70] sm:$0xff]
    %v51 = vld [vmem:[#allocation4 + $0x78] sm:$0xff]
    %v52 = vld [vmem:[#allocation4 + $0x80] sm:$0xff]
    %v53 = vld [vmem:[#allocation4 + $0x88] sm:$0xff]
    %v54 = vld [vmem:[#allocation4 + $0x90] sm:$0xff]
    %v55 = vld [vmem:[#allocation4 + $0x98] sm:$0xff]
    %v56 = vld [vmem:[#allocation4 + $0xa0] sm:$0xff]
    %v57 = vld [vmem:[#allocation4 + $0xa8] sm:$0xff]
    %v58 = vld [vmem:[#allocation4 + $0xb0] sm:$0xff]
    %v59 = vld [vmem:[#allocation4 + $0xb8] sm:$0xff]
    %v60 = vld [vmem:[#allocation4 + $0xc0] sm:$0xff]
    %v61 = vld [vmem:[#allocation4 + $0xc8] sm:$0xff]
    %v62 = vld [vmem:[#allocation4 + $0xd0] sm:$0xff]
    %v63 = vld [vmem:[#allocation4 + $0xd8] sm:$0xff]
    %v64 = vld [vmem:[#allocation4 + $0xe0] sm:$0xff]
    %v65 = vld [vmem:[#allocation4 + $0xe8] sm:$0xff]
    %v66 = vld [vmem:[#allocation4 + $0xf0] sm:$0xff]
    %v67 = vld [vmem:[#allocation4 + $0xf8] sm:$0xff]
    %v100 = vcombine.high %v36, %v36
    %v101 = vcombine.high %v37, %v37
    %v102 = vcombine.high %v38, %v38
    %v103 = vcombine.high %v39, %v39
    %v104 = vcombine.high %v40, %v40
    %v105 = vcombine.high %v41, %v41
    %v106 = vcombine.high %v42, %v42
    %v107 = vcombine.high %v43, %v43
    %v108 = vcombine.high %v44, %v44
    %v109 = vcombine.high %v45, %v45
    %v110 = vcombine.high %v46, %v46
    %v111 = vcombine.high %v47, %v47
    %v112 = vcombine.high %v48, %v48
    %v113 = vcombine.high %v49, %v49
    %v114 = vcombine.high %v50, %v50
    %v115 = vcombine.high %v51, %v51
    %v116 = vcombine.high %v52, %v52
    %v117 = vcombine.high %v53, %v53
    %v118 = vcombine.high %v54, %v54
    %v119 = vcombine.high %v55, %v55
    %v120 = vcombine.high %v56, %v56
    %v121 = vcombine.high %v57, %v57
    %v122 = vcombine.high %v58, %v58
    %v123 = vcombine.high %v59, %v59
    %v124 = vcombine.high %v60, %v60
    %v125 = vcombine.high %v61, %v61
    %v126 = vcombine.high %v62, %v62
    %v127 = vcombine.high %v63, %v63
    %v128 = vcombine.high %v64, %v64
    %v129 = vcombine.high %v65, %v65
    %v130 = vcombine.high %v66, %v66
    %v131 = vcombine.high %v67, %v67
    %s164 = sand.u32 %s35, 8191
    %s165 = sand.u32 %s164, 127
    %s166 = sshrl.u32 %s164, 7
    %167 = vrot.lane.b32.xlu0 %v36, %s165
    %v168 = vpop.permute.xlu0 %167
    %169 = vrot.lane.b32.xlu0 %v100, %s165
    %v170 = vpop.permute.xlu0 %169
    %171 = vrot.lane.b32.xlu0 %v37, %s165
    %v172 = vpop.permute.xlu0 %171
    %173 = vrot.lane.b32.xlu0 %v101, %s165
    %v174 = vpop.permute.xlu0 %173
    %175 = vrot.lane.b32.xlu0 %v38, %s165
    %v176 = vpop.permute.xlu0 %175
    %177 = vrot.lane.b32.xlu0 %v102, %s165
    %v178 = vpop.permute.xlu0 %177
    %179 = vrot.lane.b32.xlu0 %v39, %s165
    %v180 = vpop.permute.xlu0 %179
    %181 = vrot.lane.b32.xlu0 %v103, %s165
    %v182 = vpop.permute.xlu0 %181
    %183 = vrot.lane.b32.xlu0 %v40, %s165
    %v184 = vpop.permute.xlu0 %183
    %185 = vrot.lane.b32.xlu0 %v104, %s165
    %v186 = vpop.permute.xlu0 %185
    %187 = vrot.lane.b32.xlu0 %v41, %s165
    %v188 = vpop.permute.xlu0 %187
    %189 = vrot.lane.b32.xlu0 %v105, %s165
    %v190 = vpop.permute.xlu0 %189
    %191 = vrot.lane.b32.xlu0 %v42, %s165
    %v192 = vpop.permute.xlu0 %191
    %193 = vrot.lane.b32.xlu0 %v106, %s165
    %v194 = vpop.permute.xlu0 %193
    %195 = vrot.lane.b32.xlu0 %v43, %s165
    %v196 = vpop.permute.xlu0 %195
    %197 = vrot.lane.b32.xlu0 %v107, %s165
    %v198 = vpop.permute.xlu0 %197
    %199 = vrot.lane.b32.xlu0 %v44, %s165
    %v200 = vpop.permute.xlu0 %199
    %201 = vrot.lane.b32.xlu0 %v108, %s165
    %v202 = vpop.permute.xlu0 %201
    %203 = vrot.lane.b32.xlu0 %v45, %s165
    %v204 = vpop.permute.xlu0 %203
    %205 = vrot.lane.b32.xlu0 %v109, %s165
    %v206 = vpop.permute.xlu0 %205
    %207 = vrot.lane.b32.xlu0 %v46, %s165
    %v208 = vpop.permute.xlu0 %207
    %209 = vrot.lane.b32.xlu0 %v110, %s165
    %v210 = vpop.permute.xlu0 %209
    %211 = vrot.lane.b32.xlu0 %v47, %s165
    %v212 = vpop.permute.xlu0 %211
    %213 = vrot.lane.b32.xlu0 %v111, %s165
    %v214 = vpop.permute.xlu0 %213
    %215 = vrot.lane.b32.xlu0 %v48, %s165
    %v216 = vpop.permute.xlu0 %215
    %217 = vrot.lane.b32.xlu0 %v112, %s165
    %v218 = vpop.permute.xlu0 %217
    %219 = vrot.lane.b32.xlu0 %v49, %s165
    %v220 = vpop.permute.xlu0 %219
    %221 = vrot.lane.b32.xlu0 %v113, %s165
    %v222 = vpop.permute.xlu0 %221
    %223 = vrot.lane.b32.xlu0 %v50, %s165
    %v224 = vpop.permute.xlu0 %223
    %225 = vrot.lane.b32.xlu0 %v114, %s165
    %v226 = vpop.permute.xlu0 %225
    %227 = vrot.lane.b32.xlu0 %v51, %s165
    %v228 = vpop.permute.xlu0 %227
    %229 = vrot.lane.b32.xlu0 %v115, %s165
    %v230 = vpop.permute.xlu0 %229
    %231 = vrot.lane.b32.xlu0 %v52, %s165
    %v232 = vpop.permute.xlu0 %231
    %233 = vrot.lane.b32.xlu0 %v116, %s165
    %v234 = vpop.permute.xlu0 %233
    %235 = vrot.lane.b32.xlu0 %v53, %s165
    %v236 = vpop.permute.xlu0 %235
    %237 = vrot.lane.b32.xlu0 %v117, %s165
    %v238 = vpop.permute.xlu0 %237
    %239 = vrot.lane.b32.xlu0 %v54, %s165
    %v240 = vpop.permute.xlu0 %239
    %241 = vrot.lane.b32.xlu0 %v118, %s165
    %v242 = vpop.permute.xlu0 %241
    %243 = vrot.lane.b32.xlu0 %v55, %s165
    %v244 = vpop.permute.xlu0 %243
    %245 = vrot.lane.b32.xlu0 %v119, %s165
    %v246 = vpop.permute.xlu0 %245
    %247 = vrot.lane.b32.xlu0 %v56, %s165
    %v248 = vpop.permute.xlu0 %247
    %249 = vrot.lane.b32.xlu0 %v120, %s165
    %v250 = vpop.permute.xlu0 %249
    %251 = vrot.lane.b32.xlu0 %v57, %s165
    %v252 = vpop.permute.xlu0 %251
    %253 = vrot.lane.b32.xlu0 %v121, %s165
    %v254 = vpop.permute.xlu0 %253
    %255 = vrot.lane.b32.xlu0 %v58, %s165
    %v256 = vpop.permute.xlu0 %255
    %257 = vrot.lane.b32.xlu0 %v122, %s165
    %v258 = vpop.permute.xlu0 %257
    %259 = vrot.lane.b32.xlu0 %v59, %s165
    %v260 = vpop.permute.xlu0 %259
    %261 = vrot.lane.b32.xlu0 %v123, %s165
    %v262 = vpop.permute.xlu0 %261
    %263 = vrot.lane.b32.xlu0 %v60, %s165
    %v264 = vpop.permute.xlu0 %263
    %265 = vrot.lane.b32.xlu0 %v124, %s165
    %v266 = vpop.permute.xlu0 %265
    %267 = vrot.lane.b32.xlu0 %v61, %s165
    %v268 = vpop.permute.xlu0 %267
    %269 = vrot.lane.b32.xlu0 %v125, %s165
    %v270 = vpop.permute.xlu0 %269
    %271 = vrot.lane.b32.xlu0 %v62, %s165
    %v272 = vpop.permute.xlu0 %271
    %273 = vrot.lane.b32.xlu0 %v126, %s165
    %v274 = vpop.permute.xlu0 %273
    %275 = vrot.lane.b32.xlu0 %v63, %s165
    %v276 = vpop.permute.xlu0 %275
    %277 = vrot.lane.b32.xlu0 %v127, %s165
    %v278 = vpop.permute.xlu0 %277
    %279 = vrot.lane.b32.xlu0 %v64, %s165
    %v280 = vpop.permute.xlu0 %279
    %281 = vrot.lane.b32.xlu0 %v128, %s165
    %v282 = vpop.permute.xlu0 %281
    %283 = vrot.lane.b32.xlu0 %v65, %s165
    %v284 = vpop.permute.xlu0 %283
    %285 = vrot.lane.b32.xlu0 %v129, %s165
    %v286 = vpop.permute.xlu0 %285
    %287 = vrot.lane.b32.xlu0 %v66, %s165
    %v288 = vpop.permute.xlu0 %287
    %289 = vrot.lane.b32.xlu0 %v130, %s165
    %v290 = vpop.permute.xlu0 %289
    %291 = vrot.lane.b32.xlu0 %v67, %s165
    %v292 = vpop.permute.xlu0 %291
    %293 = vrot.lane.b32.xlu0 %v131, %s165
    %v294 = vpop.permute.xlu0 %293
    %v295 = vstv %s165
    %v296 = vlaneseq
    %v297 = vand.u32 %v296, 127
    %vm298 = vcmp.lt.s32.totalorder %v297, %v295
    %v299 = vsel %vm298, %v292, %v294
    %v300 = vsel %vm298, %v290, %v292
    %v301 = vsel %vm298, %v288, %v290
    %v302 = vsel %vm298, %v286, %v288
    %v303 = vsel %vm298, %v284, %v286
    %v304 = vsel %vm298, %v282, %v284
    %v305 = vsel %vm298, %v280, %v282
    %v306 = vsel %vm298, %v278, %v280
    %v307 = vsel %vm298, %v276, %v278
    %v308 = vsel %vm298, %v274, %v276
    %v309 = vsel %vm298, %v272, %v274
    %v310 = vsel %vm298, %v270, %v272
    %v311 = vsel %vm298, %v268, %v270
    %v312 = vsel %vm298, %v266, %v268
    %v313 = vsel %vm298, %v264, %v266
    %v314 = vsel %vm298, %v262, %v264
    %v315 = vsel %vm298, %v260, %v262
    %v316 = vsel %vm298, %v258, %v260
    %v317 = vsel %vm298, %v256, %v258
    %v318 = vsel %vm298, %v254, %v256
    %v319 = vsel %vm298, %v252, %v254
    %v320 = vsel %vm298, %v250, %v252
    %v321 = vsel %vm298, %v248, %v250
    %v322 = vsel %vm298, %v246, %v248
    %v323 = vsel %vm298, %v244, %v246
    %v324 = vsel %vm298, %v242, %v244
    %v325 = vsel %vm298, %v240, %v242
    %v326 = vsel %vm298, %v238, %v240
    %v327 = vsel %vm298, %v236, %v238
    %v328 = vsel %vm298, %v234, %v236
    %v329 = vsel %vm298, %v232, %v234
    %v330 = vsel %vm298, %v230, %v232
    %v331 = vsel %vm298, %v228, %v230
    %v332 = vsel %vm298, %v226, %v228
    %v333 = vsel %vm298, %v224, %v226
    %v334 = vsel %vm298, %v222, %v224
    %v335 = vsel %vm298, %v220, %v222
    %v336 = vsel %vm298, %v218, %v220
    %v337 = vsel %vm298, %v216, %v218
    %v338 = vsel %vm298, %v214, %v216
    %v339 = vsel %vm298, %v212, %v214
    %v340 = vsel %vm298, %v210, %v212
    %v341 = vsel %vm298, %v208, %v210
    %v342 = vsel %vm298, %v206, %v208
    %v343 = vsel %vm298, %v204, %v206
    %v344 = vsel %vm298, %v202, %v204
    %v345 = vsel %vm298, %v200, %v202
    %v346 = vsel %vm298, %v198, %v200
    %v347 = vsel %vm298, %v196, %v198
    %v348 = vsel %vm298, %v194, %v196
    %v349 = vsel %vm298, %v192, %v194
    %v350 = vsel %vm298, %v190, %v192
    %v351 = vsel %vm298, %v188, %v190
    %v352 = vsel %vm298, %v186, %v188
    %v353 = vsel %vm298, %v184, %v186
    %v354 = vsel %vm298, %v182, %v184
    %v355 = vsel %vm298, %v180, %v182
    %v356 = vsel %vm298, %v178, %v180
    %v357 = vsel %vm298, %v176, %v178
    %v358 = vsel %vm298, %v174, %v176
    %v359 = vsel %vm298, %v172, %v174
    %v360 = vsel %vm298, %v170, %v172
    %v361 = vsel %vm298, %v168, %v170
    %v362 = vsel %vm298, %v294, %v168
    %s363 = sand.u32 %s166, 1
    %v364 = vstv %s363
    %vm365 = vcmp.ne.s32.totalorder %v364, 0
    %v366 = vsel %vm365, %v299, %v362
    %v367 = vsel %vm365, %v362, %v361
    %v368 = vsel %vm365, %v361, %v360
    %v369 = vsel %vm365, %v360, %v359
    %v370 = vsel %vm365, %v359, %v358
    %v371 = vsel %vm365, %v358, %v357
    %v372 = vsel %vm365, %v357, %v356
    %v373 = vsel %vm365, %v356, %v355
    %v374 = vsel %vm365, %v355, %v354
    %v375 = vsel %vm365, %v354, %v353
    %v376 = vsel %vm365, %v353, %v352
    %v377 = vsel %vm365, %v352, %v351
    %v378 = vsel %vm365, %v351, %v350
    %v379 = vsel %vm365, %v350, %v349
    %v380 = vsel %vm365, %v349, %v348
    %v381 = vsel %vm365, %v348, %v347
    %v382 = vsel %vm365, %v347, %v346
    %v383 = vsel %vm365, %v346, %v345
    %v384 = vsel %vm365, %v345, %v344
    %v385 = vsel %vm365, %v344, %v343
    %v386 = vsel %vm365, %v343, %v342
    %v387 = vsel %vm365, %v342, %v341
    %v388 = vsel %vm365, %v341, %v340
    %v389 = vsel %vm365, %v340, %v339
    %v390 = vsel %vm365, %v339, %v338
    %v391 = vsel %vm365, %v338, %v337
    %v392 = vsel %vm365, %v337, %v336
    %v393 = vsel %vm365, %v336, %v335
    %v394 = vsel %vm365, %v335, %v334
    %v395 = vsel %vm365, %v334, %v333
    %v396 = vsel %vm365, %v333, %v332
    %v397 = vsel %vm365, %v332, %v331
    %v398 = vsel %vm365, %v331, %v330
    %v399 = vsel %vm365, %v330, %v329
    %v400 = vsel %vm365, %v329, %v328
    %v401 = vsel %vm365, %v328, %v327
    %v402 = vsel %vm365, %v327, %v326
    %v403 = vsel %vm365, %v326, %v325
    %v404 = vsel %vm365, %v325, %v324
    %v405 = vsel %vm365, %v324, %v323
    %v406 = vsel %vm365, %v323, %v322
    %v407 = vsel %vm365, %v322, %v321
    %v408 = vsel %vm365, %v321, %v320
    %v409 = vsel %vm365, %v320, %v319
    %v410 = vsel %vm365, %v319, %v318
    %v411 = vsel %vm365, %v318, %v317
    %v412 = vsel %vm365, %v317, %v316
    %v413 = vsel %vm365, %v316, %v315
    %v414 = vsel %vm365, %v315, %v314
    %v415 = vsel %vm365, %v314, %v313
    %v416 = vsel %vm365, %v313, %v312
    %v417 = vsel %vm365, %v312, %v311
    %v418 = vsel %vm365, %v311, %v310
    %v419 = vsel %vm365, %v310, %v309
    %v420 = vsel %vm365, %v309, %v308
    %v421 = vsel %vm365, %v308, %v307
    %v422 = vsel %vm365, %v307, %v306
    %v423 = vsel %vm365, %v306, %v305
    %v424 = vsel %vm365, %v305, %v304
    %v425 = vsel %vm365, %v304, %v303
    %v426 = vsel %vm365, %v303, %v302
    %v427 = vsel %vm365, %v302, %v301
    %v428 = vsel %vm365, %v301, %v300
    %v429 = vsel %vm365, %v300, %v299
    %s430 = sand.u32 %s166, 2
    %v431 = vstv %s430
    %vm432 = vcmp.ne.s32.totalorder %v431, 0
    %v433 = vsel %vm432, %v428, %v366
    %v434 = vsel %vm432, %v429, %v367
    %v435 = vsel %vm432, %v366, %v368
    %v436 = vsel %vm432, %v367, %v369
    %v437 = vsel %vm432, %v368, %v370
    %v438 = vsel %vm432, %v369, %v371
    %v439 = vsel %vm432, %v370, %v372
    %v440 = vsel %vm432, %v371, %v373
    %v441 = vsel %vm432, %v372, %v374
    %v442 = vsel %vm432, %v373, %v375
    %v443 = vsel %vm432, %v374, %v376
    %v444 = vsel %vm432, %v375, %v377
    %v445 = vsel %vm432, %v376, %v378
    %v446 = vsel %vm432, %v377, %v379
    %v447 = vsel %vm432, %v378, %v380
    %v448 = vsel %vm432, %v379, %v381
    %v449 = vsel %vm432, %v380, %v382
    %v450 = vsel %vm432, %v381, %v383
    %v451 = vsel %vm432, %v382, %v384
    %v452 = vsel %vm432, %v383, %v385
    %v453 = vsel %vm432, %v384, %v386
    %v454 = vsel %vm432, %v385, %v387
    %v455 = vsel %vm432, %v386, %v388
    %v456 = vsel %vm432, %v387, %v389
    %v457 = vsel %vm432, %v388, %v390
    %v458 = vsel %vm432, %v389, %v391
    %v459 = vsel %vm432, %v390, %v392
    %v460 = vsel %vm432, %v391, %v393
    %v461 = vsel %vm432, %v392, %v394
    %v462 = vsel %vm432, %v393, %v395
    %v463 = vsel %vm432, %v394, %v396
    %v464 = vsel %vm432, %v395, %v397
    %v465 = vsel %vm432, %v396, %v398
    %v466 = vsel %vm432, %v397, %v399
    %v467 = vsel %vm432, %v398, %v400
    %v468 = vsel %vm432, %v399, %v401
    %v469 = vsel %vm432, %v400, %v402
    %v470 = vsel %vm432, %v401, %v403
    %v471 = vsel %vm432, %v402, %v404
    %v472 = vsel %vm432, %v403, %v405
    %v473 = vsel %vm432, %v404, %v406
    %v474 = vsel %vm432, %v405, %v407
    %v475 = vsel %vm432, %v406, %v408
    %v476 = vsel %vm432, %v407, %v409
    %v477 = vsel %vm432, %v408, %v410
    %v478 = vsel %vm432, %v409, %v411
    %v479 = vsel %vm432, %v410, %v412
    %v480 = vsel %vm432, %v411, %v413
    %v481 = vsel %vm432, %v412, %v414
    %v482 = vsel %vm432, %v413, %v415
    %v483 = vsel %vm432, %v414, %v416
    %v484 = vsel %vm432, %v415, %v417
    %v485 = vsel %vm432, %v416, %v418
    %v486 = vsel %vm432, %v417, %v419
    %v487 = vsel %vm432, %v418, %v420
    %v488 = vsel %vm432, %v419, %v421
    %v489 = vsel %vm432, %v420, %v422
    %v490 = vsel %vm432, %v421, %v423
    %v491 = vsel %vm432, %v422, %v424
    %v492 = vsel %vm432, %v423, %v425
    %v493 = vsel %vm432, %v424, %v426
    %v494 = vsel %vm432, %v425, %v427
    %v495 = vsel %vm432, %v426, %v428
    %v496 = vsel %vm432, %v427, %v429
    %s497 = sand.u32 %s166, 4
    %v498 = vstv %s497
    %vm499 = vcmp.ne.s32.totalorder %v498, 0
    %v500 = vsel %vm499, %v493, %v433
    %v501 = vsel %vm499, %v494, %v434
    %v502 = vsel %vm499, %v495, %v435
    %v503 = vsel %vm499, %v496, %v436
    %v504 = vsel %vm499, %v433, %v437
    %v505 = vsel %vm499, %v434, %v438
    %v506 = vsel %vm499, %v435, %v439
    %v507 = vsel %vm499, %v436, %v440
    %v508 = vsel %vm499, %v437, %v441
    %v509 = vsel %vm499, %v438, %v442
    %v510 = vsel %vm499, %v439, %v443
    %v511 = vsel %vm499, %v440, %v444
    %v512 = vsel %vm499, %v441, %v445
    %v513 = vsel %vm499, %v442, %v446
    %v514 = vsel %vm499, %v443, %v447
    %v515 = vsel %vm499, %v444, %v448
    %v516 = vsel %vm499, %v445, %v449
    %v517 = vsel %vm499, %v446, %v450
    %v518 = vsel %vm499, %v447, %v451
    %v519 = vsel %vm499, %v448, %v452
    %v520 = vsel %vm499, %v449, %v453
    %v521 = vsel %vm499, %v450, %v454
    %v522 = vsel %vm499, %v451, %v455
    %v523 = vsel %vm499, %v452, %v456
    %v524 = vsel %vm499, %v453, %v457
    %v525 = vsel %vm499, %v454, %v458
    %v526 = vsel %vm499, %v455, %v459
    %v527 = vsel %vm499, %v456, %v460
    %v528 = vsel %vm499, %v457, %v461
    %v529 = vsel %vm499, %v458, %v462
    %v530 = vsel %vm499, %v459, %v463
    %v531 = vsel %vm499, %v460, %v464
    %v532 = vsel %vm499, %v461, %v465
    %v533 = vsel %vm499, %v462, %v466
    %v534 = vsel %vm499, %v463, %v467
    %v535 = vsel %vm499, %v464, %v468
    %v536 = vsel %vm499, %v465, %v469
    %v537 = vsel %vm499, %v466, %v470
    %v538 = vsel %vm499, %v467, %v471
    %v539 = vsel %vm499, %v468, %v472
    %v540 = vsel %vm499, %v469, %v473
    %v541 = vsel %vm499, %v470, %v474
    %v542 = vsel %vm499, %v471, %v475
    %v543 = vsel %vm499, %v472, %v476
    %v544 = vsel %vm499, %v473, %v477
    %v545 = vsel %vm499, %v474, %v478
    %v546 = vsel %vm499, %v475, %v479
    %v547 = vsel %vm499, %v476, %v480
    %v548 = vsel %vm499, %v477, %v481
    %v549 = vsel %vm499, %v478, %v482
    %v550 = vsel %vm499, %v479, %v483
    %v551 = vsel %vm499, %v480, %v484
    %v552 = vsel %vm499, %v481, %v485
    %v553 = vsel %vm499, %v482, %v486
    %v554 = vsel %vm499, %v483, %v487
    %v555 = vsel %vm499, %v484, %v488
    %v556 = vsel %vm499, %v485, %v489
    %v557 = vsel %vm499, %v486, %v490
    %v558 = vsel %vm499, %v487, %v491
    %v559 = vsel %vm499, %v488, %v492
    %v560 = vsel %vm499, %v489, %v493
    %v561 = vsel %vm499, %v490, %v494
    %v562 = vsel %vm499, %v491, %v495
    %v563 = vsel %vm499, %v492, %v496
    %s564 = sand.u32 %s166, 8
    %v565 = vstv %s564
    %vm566 = vcmp.ne.s32.totalorder %v565, 0
    %v567 = vsel %vm566, %v556, %v500
    %v568 = vsel %vm566, %v557, %v501
    %v569 = vsel %vm566, %v558, %v502
    %v570 = vsel %vm566, %v559, %v503
    %v571 = vsel %vm566, %v560, %v504
    %v572 = vsel %vm566, %v561, %v505
    %v573 = vsel %vm566, %v562, %v506
    %v574 = vsel %vm566, %v563, %v507
    %v575 = vsel %vm566, %v500, %v508
    %v576 = vsel %vm566, %v501, %v509
    %v577 = vsel %vm566, %v502, %v510
    %v578 = vsel %vm566, %v503, %v511
    %v579 = vsel %vm566, %v504, %v512
    %v580 = vsel %vm566, %v505, %v513
    %v581 = vsel %vm566, %v506, %v514
    %v582 = vsel %vm566, %v507, %v515
    %v583 = vsel %vm566, %v508, %v516
    %v584 = vsel %vm566, %v509, %v517
    %v585 = vsel %vm566, %v510, %v518
    %v586 = vsel %vm566, %v511, %v519
    %v587 = vsel %vm566, %v512, %v520
    %v588 = vsel %vm566, %v513, %v521
    %v589 = vsel %vm566, %v514, %v522
    %v590 = vsel %vm566, %v515, %v523
    %v591 = vsel %vm566, %v516, %v524
    %v592 = vsel %vm566, %v517, %v525
    %v593 = vsel %vm566, %v518, %v526
    %v594 = vsel %vm566, %v519, %v527
    %v595 = vsel %vm566, %v520, %v528
    %v596 = vsel %vm566, %v521, %v529
    %v597 = vsel %vm566, %v522, %v530
    %v598 = vsel %vm566, %v523, %v531
    %v599 = vsel %vm566, %v524, %v532
    %v600 = vsel %vm566, %v525, %v533
    %v601 = vsel %vm566, %v526, %v534
    %v602 = vsel %vm566, %v527, %v535
    %v603 = vsel %vm566, %v528, %v536
    %v604 = vsel %vm566, %v529, %v537
    %v605 = vsel %vm566, %v530, %v538
    %v606 = vsel %vm566, %v531, %v539
    %v607 = vsel %vm566, %v532, %v540
    %v608 = vsel %vm566, %v533, %v541
    %v609 = vsel %vm566, %v534, %v542
    %v610 = vsel %vm566, %v535, %v543
    %v611 = vsel %vm566, %v536, %v544
    %v612 = vsel %vm566, %v537, %v545
    %v613 = vsel %vm566, %v538, %v546
    %v614 = vsel %vm566, %v539, %v547
    %v615 = vsel %vm566, %v540, %v548
    %v616 = vsel %vm566, %v541, %v549
    %v617 = vsel %vm566, %v542, %v550
    %v618 = vsel %vm566, %v543, %v551
    %v619 = vsel %vm566, %v544, %v552
    %v620 = vsel %vm566, %v545, %v553
    %v621 = vsel %vm566, %v546, %v554
    %v622 = vsel %vm566, %v547, %v555
    %v623 = vsel %vm566, %v548, %v556
    %v624 = vsel %vm566, %v549, %v557
    %v625 = vsel %vm566, %v550, %v558
    %v626 = vsel %vm566, %v551, %v559
    %v627 = vsel %vm566, %v552, %v560
    %v628 = vsel %vm566, %v553, %v561
    %v629 = vsel %vm566, %v554, %v562
    %v630 = vsel %vm566, %v555, %v563
    %s631 = sand.u32 %s166, 16
    %v632 = vstv %s631
    %vm633 = vcmp.ne.s32.totalorder %v632, 0
    %v634 = vsel %vm633, %v615, %v567
    %v635 = vsel %vm633, %v616, %v568
    %v636 = vsel %vm633, %v617, %v569
    %v637 = vsel %vm633, %v618, %v570
    %v638 = vsel %vm633, %v619, %v571
    %v639 = vsel %vm633, %v620, %v572
    %v640 = vsel %vm633, %v621, %v573
    %v641 = vsel %vm633, %v622, %v574
    %v642 = vsel %vm633, %v623, %v575
    %v643 = vsel %vm633, %v624, %v576
    %v644 = vsel %vm633, %v625, %v577
    %v645 = vsel %vm633, %v626, %v578
    %v646 = vsel %vm633, %v627, %v579
    %v647 = vsel %vm633, %v628, %v580
    %v648 = vsel %vm633, %v629, %v581
    %v649 = vsel %vm633, %v630, %v582
    %v650 = vsel %vm633, %v567, %v583
    %v651 = vsel %vm633, %v568, %v584
    %v652 = vsel %vm633, %v569, %v585
    %v653 = vsel %vm633, %v570, %v586
    %v654 = vsel %vm633, %v571, %v587
    %v655 = vsel %vm633, %v572, %v588
    %v656 = vsel %vm633, %v573, %v589
    %v657 = vsel %vm633, %v574, %v590
    %v658 = vsel %vm633, %v575, %v591
    %v659 = vsel %vm633, %v576, %v592
    %v660 = vsel %vm633, %v577, %v593
    %v661 = vsel %vm633, %v578, %v594
    %v662 = vsel %vm633, %v579, %v595
    %v663 = vsel %vm633, %v580, %v596
    %v664 = vsel %vm633, %v581, %v597
    %v665 = vsel %vm633, %v582, %v598
    %v666 = vsel %vm633, %v583, %v599
    %v667 = vsel %vm633, %v584, %v600
    %v668 = vsel %vm633, %v585, %v601
    %v669 = vsel %vm633, %v586, %v602
    %v670 = vsel %vm633, %v587, %v603
    %v671 = vsel %vm633, %v588, %v604
    %v672 = vsel %vm633, %v589, %v605
    %v673 = vsel %vm633, %v590, %v606
    %v674 = vsel %vm633, %v591, %v607
    %v675 = vsel %vm633, %v592, %v608
    %v676 = vsel %vm633, %v593, %v609
    %v677 = vsel %vm633, %v594, %v610
    %v678 = vsel %vm633, %v595, %v611
    %v679 = vsel %vm633, %v596, %v612
    %v680 = vsel %vm633, %v597, %v613
    %v681 = vsel %vm633, %v598, %v614
    %v682 = vsel %vm633, %v599, %v615
    %v683 = vsel %vm633, %v600, %v616
    %v684 = vsel %vm633, %v601, %v617
    %v685 = vsel %vm633, %v602, %v618
    %v686 = vsel %vm633, %v603, %v619
    %v687 = vsel %vm633, %v604, %v620
    %v688 = vsel %vm633, %v605, %v621
    %v689 = vsel %vm633, %v606, %v622
    %v690 = vsel %vm633, %v607, %v623
    %v691 = vsel %vm633, %v608, %v624
    %v692 = vsel %vm633, %v609, %v625
    %v693 = vsel %vm633, %v610, %v626
    %v694 = vsel %vm633, %v611, %v627
    %v695 = vsel %vm633, %v612, %v628
    %v696 = vsel %vm633, %v613, %v629
    %v697 = vsel %vm633, %v614, %v630
    %s698 = sand.u32 %s166, 32
    %v699 = vstv %s698
    %vm700 = vcmp.ne.s32.totalorder %v699, 0
    %v701 = vsel %vm700, %v666, %v634
    %v702 = vsel %vm700, %v667, %v635
    %v703 = vsel %vm700, %v668, %v636
    %v704 = vsel %vm700, %v669, %v637
    %v705 = vsel %vm700, %v670, %v638
    %v706 = vsel %vm700, %v671, %v639
    %v707 = vsel %vm700, %v672, %v640
    %v708 = vsel %vm700, %v673, %v641
    %v709 = vsel %vm700, %v674, %v642
    %v710 = vsel %vm700, %v675, %v643
    %v711 = vsel %vm700, %v676, %v644
    %v712 = vsel %vm700, %v677, %v645
    %v713 = vsel %vm700, %v678, %v646
    %v714 = vsel %vm700, %v679, %v647
    %v715 = vsel %vm700, %v680, %v648
    %v716 = vsel %vm700, %v681, %v649
    %v717 = vsel %vm700, %v682, %v650
    %v718 = vsel %vm700, %v683, %v651
    %v719 = vsel %vm700, %v684, %v652
    %v720 = vsel %vm700, %v685, %v653
    %v721 = vsel %vm700, %v686, %v654
    %v722 = vsel %vm700, %v687, %v655
    %v723 = vsel %vm700, %v688, %v656
    %v724 = vsel %vm700, %v689, %v657
    %v725 = vsel %vm700, %v690, %v658
    %v726 = vsel %vm700, %v691, %v659
    %v727 = vsel %vm700, %v692, %v660
    %v728 = vsel %vm700, %v693, %v661
    %v729 = vsel %vm700, %v694, %v662
    %v730 = vsel %vm700, %v695, %v663
    %v731 = vsel %vm700, %v696, %v664
    %v732 = vsel %vm700, %v697, %v665
    %v733 = vsel %vm700, %v634, %v666
    %v734 = vsel %vm700, %v635, %v667
    %v735 = vsel %vm700, %v636, %v668
    %v736 = vsel %vm700, %v637, %v669
    %v737 = vsel %vm700, %v638, %v670
    %v738 = vsel %vm700, %v639, %v671
    %v739 = vsel %vm700, %v640, %v672
    %v740 = vsel %vm700, %v641, %v673
    %v741 = vsel %vm700, %v642, %v674
    %v742 = vsel %vm700, %v643, %v675
    %v743 = vsel %vm700, %v644, %v676
    %v744 = vsel %vm700, %v645, %v677
    %v745 = vsel %vm700, %v646, %v678
    %v746 = vsel %vm700, %v647, %v679
    %v747 = vsel %vm700, %v648, %v680
    %v748 = vsel %vm700, %v649, %v681
    %v749 = vsel %vm700, %v650, %v682
    %v750 = vsel %vm700, %v651, %v683
    %v751 = vsel %vm700, %v652, %v684
    %v752 = vsel %vm700, %v653, %v685
    %v753 = vsel %vm700, %v654, %v686
    %v754 = vsel %vm700, %v655, %v687
    %v755 = vsel %vm700, %v656, %v688
    %v756 = vsel %vm700, %v657, %v689
    %v757 = vsel %vm700, %v658, %v690
    %v758 = vsel %vm700, %v659, %v691
    %v759 = vsel %vm700, %v660, %v692
    %v760 = vsel %vm700, %v661, %v693
    %v761 = vsel %vm700, %v662, %v694
    %v762 = vsel %vm700, %v663, %v695
    %v763 = vsel %vm700, %v664, %v696
    %v764 = vsel %vm700, %v665, %v697
    %v829 = vcombine.low %v701, %v702
    %v830 = vcombine.low %v703, %v704
    %v831 = vcombine.low %v705, %v706
    %v832 = vcombine.low %v707, %v708
    %v833 = vcombine.low %v709, %v710
    %v834 = vcombine.low %v711, %v712
    %v835 = vcombine.low %v713, %v714
    %v836 = vcombine.low %v715, %v716
    %v837 = vcombine.low %v717, %v718
    %v838 = vcombine.low %v719, %v720
    %v839 = vcombine.low %v721, %v722
    %v840 = vcombine.low %v723, %v724
    %v841 = vcombine.low %v725, %v726
    %v842 = vcombine.low %v727, %v728
    %v843 = vcombine.low %v729, %v730
    %v844 = vcombine.low %v731, %v732
    %v845 = vcombine.low %v733, %v734
    %v846 = vcombine.low %v735, %v736
    %v847 = vcombine.low %v737, %v738
    %v848 = vcombine.low %v739, %v740
    %v849 = vcombine.low %v741, %v742
    %v850 = vcombine.low %v743, %v744
    %v851 = vcombine.low %v745, %v746
    %v852 = vcombine.low %v747, %v748
    %v853 = vcombine.low %v749, %v750
    %v854 = vcombine.low %v751, %v752
    %v855 = vcombine.low %v753, %v754
    %v856 = vcombine.low %v755, %v756
    %v857 = vcombine.low %v757, %v758
    %v858 = vcombine.low %v759, %v760
    %v859 = vcombine.low %v761, %v762
    %v860 = vcombine.low %v763, %v764
    %893 = vst [vmem:[#allocation7] sm:$0xff] %v829
    %894 = vst [vmem:[#allocation7 + $0x8] sm:$0xff] %v830
    %895 = vst [vmem:[#allocation7 + $0x10] sm:$0xff] %v831
    %896 = vst [vmem:[#allocation7 + $0x18] sm:$0xff] %v832
    %897 = vst [vmem:[#allocation7 + $0x20] sm:$0xff] %v833
    %898 = vst [vmem:[#allocation7 + $0x28] sm:$0xff] %v834
    %899 = vst [vmem:[#allocation7 + $0x30] sm:$0xff] %v835
    %900 = vst [vmem:[#allocation7 + $0x38] sm:$0xff] %v836
    %901 = vst [vmem:[#allocation7 + $0x40] sm:$0xff] %v837
    %902 = vst [vmem:[#allocation7 + $0x48] sm:$0xff] %v838
    %903 = vst [vmem:[#allocation7 + $0x50] sm:$0xff] %v839
    %904 = vst [vmem:[#allocation7 + $0x58] sm:$0xff] %v840
    %905 = vst [vmem:[#allocation7 + $0x60] sm:$0xff] %v841
    %906 = vst [vmem:[#allocation7 + $0x68] sm:$0xff] %v842
    %907 = vst [vmem:[#allocation7 + $0x70] sm:$0xff] %v843
    %908 = vst [vmem:[#allocation7 + $0x78] sm:$0xff] %v844
    %909 = vst [vmem:[#allocation7 + $0x80] sm:$0xff] %v845
    %910 = vst [vmem:[#allocation7 + $0x88] sm:$0xff] %v846
    %911 = vst [vmem:[#allocation7 + $0x90] sm:$0xff] %v847
    %912 = vst [vmem:[#allocation7 + $0x98] sm:$0xff] %v848
    %913 = vst [vmem:[#allocation7 + $0xa0] sm:$0xff] %v849
    %914 = vst [vmem:[#allocation7 + $0xa8] sm:$0xff] %v850
    %915 = vst [vmem:[#allocation7 + $0xb0] sm:$0xff] %v851
    %916 = vst [vmem:[#allocation7 + $0xb8] sm:$0xff] %v852
    %917 = vst [vmem:[#allocation7 + $0xc0] sm:$0xff] %v853
    %918 = vst [vmem:[#allocation7 + $0xc8] sm:$0xff] %v854
    %919 = vst [vmem:[#allocation7 + $0xd0] sm:$0xff] %v855
    %920 = vst [vmem:[#allocation7 + $0xd8] sm:$0xff] %v856
    %921 = vst [vmem:[#allocation7 + $0xe0] sm:$0xff] %v857
    %922 = vst [vmem:[#allocation7 + $0xe8] sm:$0xff] %v858
    %923 = vst [vmem:[#allocation7 + $0xf0] sm:$0xff] %v859
    %924 = vst [vmem:[#allocation7 + $0xf8] sm:$0xff] %v860
    // Predicated region
    $region10: #{tpu_custom_call.1} parent=1 // pred_check
      _
    $region11: #{tpu_custom_call.1} parent=1 // pred_check_branch
      %926 = sbr.rel (0) target = $region13
    $region12: #{tpu_custom_call.1} parent=1 // pred_region
      %s928 = ssub.s32 4096, 4096
      %929 = vsyncadd [#allocation6], %s928
      %s931 = sshll.u32 [#allocation7], 4
      %s932 = int_to_ptr.vmem [resolvable:$true] %s931
      %934 = dma.vmem_to_hbm [thread:$0]  %s932, 4096, %s2, [#allocation6]
    $region13: #{tpu_custom_call.1} parent=1 // pred_fallthru
      _
    // Predicated region
    $region14: #{tpu_custom_call.1} parent=1 // pred_check
      _
    $region15: #{tpu_custom_call.1} parent=1 // pred_check_branch
      %936 = sbr.rel (0) target = $region17
    $region16: #{tpu_custom_call.1} parent=1 // pred_region
      %937 = dma.done [#allocation6], 4096
    $region17: #{tpu_custom_call.1} parent=1 // pred_fallthru
      _
    %938 = vsyncpa [#allocation5], 1
    %939 = vsyncpa [#allocation6], 1

</llo_original>
